<compile_context>
chip_gen: v7x
topology: tpu7x:2x2x1
jax: 0.10.0
libtpu: 0.0.40
codegen_flags: <defaults>
</compile_context>

<pallas_src>
import jax
import jax.numpy as jnp
from jax.experimental import pallas as pl
from jax.experimental.pallas import tpu as pltpu


def _cdiv(a, b):
    return -(-a // b)


def _round_up(a, b):
    return _cdiv(a, b) * b


def _dtm_matmul_kernel(x_ref, w_ref, b_ref, o_ref):
    # x_ref: (tm, 2*C_in) bf16, w_ref: (2*C_in, 128) bf16,
    # b_ref: (1, 128) f32,     o_ref: (tm, 128) bf16
    acc = jnp.dot(x_ref[...], w_ref[...], preferred_element_type=jnp.float32)
    o_ref[...] = (acc + b_ref[...]).astype(o_ref.dtype)


def dtm_forward(x, weight, bias, input_resolution):
    """Pallas implementation of DTM.forward.

    Args:
      x:      (B, H*W, C) tokens, C == 96 (channels-last).
      weight: ConvTranspose2d weight, (C_in=96, C_out=4, Kh=4, Kw=4).
      bias:   (C_out,)
      input_resolution: (H, W)

    Returns:
      (B, 4, 4*H, 4*W) NCHW, same semantics/dtype as the PyTorch module.
    """
    H, W = input_resolution
    B, L, C = x.shape
    assert L == H * W, 'input feature has wrong size'
    assert H % 2 == 0 and W % 2 == 0, f'x size ({H}*{W}) are not even.'
    C_in, C_out, Kh, Kw = weight.shape
    assert C == C_in

    out_dtype = x.dtype
    compute_dtype = jnp.bfloat16          # memory-bound: halve HBM streams

    N = C_out * Kh * Kw                   # 64 output cols per pixel
    M = B * H * W                         # total pixels
    M2 = M // 2                           # packed rows: two W-adjacent pixels per row
    K2 = 2 * C_in                         # 192
    N2 = 2 * N                            # 128 -> fully lane-dense stores

    # --- operand packing (free reshapes / tiny constants, built once) ---------
    # x2 row r = [pixel 2r channels | pixel 2r+1 channels]; W even => the pair
    # never straddles an image row or a batch boundary.
    x2 = x.astype(compute_dtype).reshape(M2, K2)

    # Block-diagonal weight (192,128) with column order (co, kh, pixel, kw) so the
    # post-kernel NCHW interleave has an 8-element (pixel,kw) contiguous inner run.
    eye2 = jnp.eye(2, dtype=compute_dtype)                       # pixel block-diag
    w6 = (weight.astype(compute_dtype)[None, :, :, :, None, :]   # (2,Cin,Co,Kh,2,Kw)
          * eye2[:, None, None, None, :, None])
    w2 = w6.reshape(K2, N2)
    b2 = jnp.broadcast_to(
        bias.astype(jnp.float32)[:, None, None, None],
        (C_out, Kh, 2, Kw)).reshape(1, N2)                       # (1, 128) f32

    # --- tile selection --------------------------------------------------------
    # Big tiles for HBM roofline, but >= ~8 grid steps so prefetch(i+1)/writeback(i-1)
    # overlap compute (and both v7x TensorCores stay busy under "parallel").
    min_sub = 16 if compute_dtype == jnp.bfloat16 else 8
    tm = min(4096, max(min_sub, _round_up(_cdiv(M2, 8), min_sub)))
    grid = _cdiv(M2, tm)   # last block may be partial: rows are independent and the
                           # out-of-range writeback is masked (no pad / slice passes)

    y2_bytes = M2 * N2 * (2 if compute_dtype == jnp.bfloat16 else 4)
    cost = pl.CostEstimate(
        flops=2 * grid * tm * K2 * N2,
        bytes_accessed=int(x2.size * x2.dtype.itemsize
                           + w2.size * w2.dtype.itemsize
                           + b2.size * b2.dtype.itemsize
                           + y2_bytes),
        transcendentals=0)

    y2 = pl.pallas_call(
        _dtm_matmul_kernel,
        out_shape=jax.ShapeDtypeStruct((M2, N2), compute_dtype),
        grid_spec=pltpu.PrefetchScalarGridSpec(
            num_scalar_prefetch=0,
            grid=(grid,),
            in_specs=[
                pl.BlockSpec((tm, K2), lambda i: (i, 0)),
                pl.BlockSpec((K2, N2), lambda i: (0, 0)),    # resident weight
                pl.BlockSpec((1, N2), lambda i: (0, 0)),     # resident bias
            ],
            out_specs=pl.BlockSpec((tm, N2), lambda i: (i, 0)),
        ),
        compiler_params=pltpu.CompilerParams(
            dimension_semantics=("parallel",),
            vmem_limit_bytes=32 * 1024 * 1024),
        cost_estimate=cost,
    )(x2, w2, b2)

    # (M2,128) -> (B,H,W/2,Co,Kh,2*Kw) -> NCHW, 8-element contiguous inner run.
    # TODO(synk): this NCHW interleave is one XLA transpose pass; it can only be
    # deleted if the consumer accepts the kernel-native (B,H,W,Co,Kh,Kw) layout.
    y = y2.reshape(B, H, W // 2, C_out, Kh, 2 * Kw)
    y = jnp.transpose(y, (0, 3, 1, 4, 2, 5))                 # (B,Co,H,Kh,W/2,2Kw)
    y = y.reshape(B, C_out, H * Kh, W * Kw)                  # NCHW
    return y.astype(out_dtype)


def _reference(x, weight, bias, H, W):
    B, L, C = x.shape
    C_out = weight.shape[1]
    ref = jnp.einsum('bhwc,cokl->bohkwl', x.reshape(B, H, W, C), weight,
                     precision=jax.lax.Precision.HIGHEST)
    ref = ref.reshape(B, C_out, 4 * H, 4 * W) + bias[None, :, None, None]
    return ref


if __name__ == "__main__":
    key = jax.random.PRNGKey(0)
    k_x, k_w, k_b, k_x2 = jax.random.split(key, 4)

    # Deterministic parameters (shapes of nn.ConvTranspose2d(96, 4, 4, 4)).
    weight = jax.random.normal(k_w, (96, 4, 4, 4), dtype=jnp.float32) * 0.02
    bias = jax.random.normal(k_b, (4,), dtype=jnp.float32) * 0.02

    fwd = jax.jit(dtm_forward, static_argnums=(3,))

    # Case 1: M2 divides the tile exactly (8 grid steps of tm=128).
    B, H, W, C = 2, 32, 32, 96           # C must be 96 to match trans_conv in-channels
    x = jax.random.normal(k_x, (B, H * W, C), dtype=jnp.float32)
    out = fwd(x, weight, bias, (H, W))
    jax.block_until_ready(out)
    assert out.shape == (B, 4, 4 * H, 4 * W), out.shape
    ref = _reference(x, weight, bias, H, W)
    assert jnp.allclose(out, ref, rtol=5e-3, atol=5e-3), \
        float(jnp.max(jnp.abs(out - ref)))

    # Case 2: ragged tail -> exercises the masked partial final block (no pad/slice).
    B2, H2, W2 = 3, 10, 10               # M2 = 150, tm = 32, grid = 5 (last block 22 rows)
    x_r = jax.random.normal(k_x2, (B2, H2 * W2, C), dtype=jnp.float32)
    out_r = fwd(x_r, weight, bias, (H2, W2))
    jax.block_until_ready(out_r)
    assert out_r.shape == (B2, 4, 4 * H2, 4 * W2), out_r.shape
    ref_r = _reference(x_r, weight, bias, H2, W2)
    assert jnp.allclose(out_r, ref_r, rtol=5e-3, atol=5e-3), \
        float(jnp.max(jnp.abs(out_r - ref_r)))

    print("KERNEL_OK")
</pallas_src>

<mosaic_0001>
module attributes {stable_mosaic.version = 11 : i64} {
  func.func @_dtm_matmul_kernel(%arg0: i32, %arg1: memref<128x192xbf16, #tpu.memory_space<vmem>>, %arg2: memref<192x128xbf16, #tpu.memory_space<vmem>>, %arg3: memref<1x128xf32, #tpu.memory_space<vmem>>, %arg4: memref<128x128xbf16, #tpu.memory_space<vmem>>) attributes {dimension_semantics = [#tpu.dimension_semantics<parallel>], iteration_bounds = array<i64: 8>, scalar_prefetch = 0 : i64, scratch_operands = 0 : i64, tpu.core_type = #tpu.core_type<tc>, window_params = [{transform_indices = @transform_0, window_bounds = array<i64: 128, 192>}, {pipeline_mode = #tpu.pipeline_mode<synchronous>, transform_indices = @transform_1, window_bounds = array<i64: 192, 128>}, {pipeline_mode = #tpu.pipeline_mode<synchronous>, transform_indices = @transform_2, window_bounds = array<i64: 1, 128>}, {transform_indices = @transform_3, window_bounds = array<i64: 128, 128>}]} {
    %c0 = arith.constant 0 : index
    %c0_0 = arith.constant 0 : index
    %0 = vector.load %arg1[%c0, %c0_0] : memref<128x192xbf16, #tpu.memory_space<vmem>>, vector<128x192xbf16>
    %c0_1 = arith.constant 0 : index
    %c0_2 = arith.constant 0 : index
    %1 = vector.load %arg2[%c0_1, %c0_2] : memref<192x128xbf16, #tpu.memory_space<vmem>>, vector<192x128xbf16>
    %cst = arith.constant dense<0.000000e+00> : vector<128x128xf32>
    %2 = tpu.matmul %0, %1, %cst {dimension_numbers = #tpu.dot_dimension_numbers<[1], [0], [0], [1], [0, 0, 1, 1], [], []>} : vector<128x192xbf16>, vector<192x128xbf16>, vector<128x128xf32> -> vector<128x128xf32>
    %c0_3 = arith.constant 0 : index
    %c0_4 = arith.constant 0 : index
    %3 = vector.load %arg3[%c0_3, %c0_4] : memref<1x128xf32, #tpu.memory_space<vmem>>, vector<1x128xf32>
    %4 = vector.broadcast %3 : vector<1x128xf32> to vector<128x128xf32>
    %5 = arith.addf %2, %4 : vector<128x128xf32>
    %6 = arith.truncf %5 : vector<128x128xf32> to vector<128x128xbf16>
    %c0_5 = arith.constant 0 : index
    %c0_6 = arith.constant 0 : index
    %7 = vector.load %arg4[%c0_5, %c0_6] : memref<128x128xbf16, #tpu.memory_space<vmem>>, vector<128x128xbf16>
    tpu.vector_store %arg4[%c0_5, %c0_6], %6 {strides = array<i32>} : memref<128x128xbf16, #tpu.memory_space<vmem>>, vector<128x128xbf16>,
    return
  }
  func.func @transform_0(%arg0: i32) -> (i32, i32) {
    %c0_i32 = arith.constant 0 : i32
    %c0_i32_0 = arith.constant 0 : i32
    return %arg0, %c0_i32 : i32, i32
  }
  func.func @transform_1(%arg0: i32) -> (i32, i32) {
    %c0_i32 = arith.constant 0 : i32
    %c0_i32_0 = arith.constant 0 : i32
    %c0_i32_1 = arith.constant 0 : i32
    return %c0_i32, %c0_i32_0 : i32, i32
  }
  func.func @transform_2(%arg0: i32) -> (i32, i32) {
    %c0_i32 = arith.constant 0 : i32
    %c0_i32_0 = arith.constant 0 : i32
    %c0_i32_1 = arith.constant 0 : i32
    return %c0_i32, %c0_i32_0 : i32, i32
  }
  func.func @transform_3(%arg0: i32) -> (i32, i32) {
    %c0_i32 = arith.constant 0 : i32
    %c0_i32_0 = arith.constant 0 : i32
    return %arg0, %c0_i32 : i32, i32
  }
}

</mosaic_0001>

<llo_original>
// kernel: dtm_forward.1
$region0: #{dtm_forward.1}
  #allocation0 [shape = 'u32[]', space=smem, size = 0x4, offset = 0x4, fixed_abs, tag = 'smem constant byte address 0x4 - core index']
  #allocation1 [shape = 'u32[144,128]{1,0:T(1,128)}', space=vmem, size = 0x12000, scoped, tag = 'internal scratch']
  %s0 = inlined_call_operand.vmem [shape: bf16[1024,192], index: 0, kind: input, shape index: {}]
  %s1 = inlined_call_operand.vmem [shape: bf16[192,128], index: 1, kind: input, shape index: {}]
  %s2 = inlined_call_operand.vmem [shape: f32[1,128], index: 2, kind: input, shape index: {}]
  %s3 = inlined_call_operand.vmem [shape: bf16[1024,128], index: 3, kind: output, shape index: {}]
  %s4 = sld [smem:[#allocation0]]
  $region45: #{dtm_forward.1} parent=0
    _
  %s6 = ssub.s32 1, %s4
  %s7 = scalar_select 0, %s6, %s4
  loop: start=0, step=1, limit=10
  $region2: #{dtm_forward.1} parent=0 // loop_pre_header
    _
  $region3: #{dtm_forward.1} parent=0 // loop_header
    %s9 = sphi 0, %s13
    %p10 = scmp.ge.s32.totalorder %s9, 10
    %s19 = sphi 0, %s21
    %s22 = sphi 0, %s19
    %s23 = sphi 0, %s22
    %s39 = sphi 0, %s23
    %s43 = sphi 0, %s43
    %s45 = sphi 0, %s43
    %s46 = sphi 0, %s45
    %s60 = sphi 0, %s46
    %s64 = sphi 0, %s64
    %s66 = sphi 0, %s64
    %s67 = sphi 0, %s66
    %s81 = sphi 0, %s67
    %s87 = sphi 0, %s89
    %s90 = sphi 0, %s87
    %s91 = sphi 0, %s90
    %s107 = sphi 0, %s91
  $region4: #{dtm_forward.1} parent=0 // loop_header_branch
    %12 = sbr.rel (%p10) target = $region8
  $region5: #{dtm_forward.1} parent=0 // loop_body
    %s14 = ssub.s32 %s9, 1
    %s15 = ssub.s32 %s9, 2
    %s16 = sadd.s32 %s9, 1
    %s17 = ssub.s32 %s9, %s16
    %p18 = scmp.eq.s32.totalorder %s17, 0
    %s20 = sadd.s32 %s19, 1
    %s21 = scalar_select %p18, %s19, %s20
    %p24 = pneg %p18
    %p25 = scmp.eq.s32.totalorder %s9, 7
    %p26 = por %p24, %p25
    %p27 = scmp.ne.s32.totalorder %s19, %s22
    %p28 = scmp.eq.s32.totalorder %s9, 0
    %p29 = por %p27, %p28
    %p30 = scmp.ne.s32.totalorder %s19, %s22
    %p31 = scmp.eq.s32.totalorder %s14, 7
    %p32 = por %p30, %p31
    %p33 = scmp.ne.s32.totalorder %s22, %s23
    %p34 = scmp.eq.s32.totalorder %s14, 0
    %p35 = por %p33, %p34
    %p36 = scmp.ne.s32.totalorder %s22, %s23
    %p37 = scmp.eq.s32.totalorder %s15, 7
    %p38 = por %p36, %p37
    %p40 = scmp.ne.s32.totalorder %s23, %s39
    %p41 = scmp.eq.s32.totalorder %s15, 0
    %p42 = por %p40, %p41
    %s44 = sadd.s32 %s43, 1
    %p47 = scmp.eq.s32.totalorder %s9, 7
    %p48 = scmp.ne.s32.totalorder %s43, %s45
    %p49 = scmp.eq.s32.totalorder %s9, 0
    %p50 = por %p48, %p49
    %p51 = scmp.ne.s32.totalorder %s43, %s45
    %p52 = scmp.eq.s32.totalorder %s14, 7
    %p53 = por %p51, %p52
    %p54 = scmp.ne.s32.totalorder %s45, %s46
    %p55 = scmp.eq.s32.totalorder %s14, 0
    %p56 = por %p54, %p55
    %p57 = scmp.ne.s32.totalorder %s45, %s46
    %p58 = scmp.eq.s32.totalorder %s15, 7
    %p59 = por %p57, %p58
    %p61 = scmp.ne.s32.totalorder %s46, %s60
    %p62 = scmp.eq.s32.totalorder %s15, 0
    %p63 = por %p61, %p62
    %s65 = sadd.s32 %s64, 1
    %p68 = scmp.eq.s32.totalorder %s9, 7
    %p69 = scmp.ne.s32.totalorder %s64, %s66
    %p70 = scmp.eq.s32.totalorder %s9, 0
    %p71 = por %p69, %p70
    %p72 = scmp.ne.s32.totalorder %s64, %s66
    %p73 = scmp.eq.s32.totalorder %s14, 7
    %p74 = por %p72, %p73
    %p75 = scmp.ne.s32.totalorder %s66, %s67
    %p76 = scmp.eq.s32.totalorder %s14, 0
    %p77 = por %p75, %p76
    %p78 = scmp.ne.s32.totalorder %s66, %s67
    %p79 = scmp.eq.s32.totalorder %s15, 7
    %p80 = por %p78, %p79
    %p82 = scmp.ne.s32.totalorder %s67, %s81
    %p83 = scmp.eq.s32.totalorder %s15, 0
    %p84 = por %p82, %p83
    %s85 = ssub.s32 %s9, %s16
    %p86 = scmp.eq.s32.totalorder %s85, 0
    %s88 = sadd.s32 %s87, 1
    %s89 = scalar_select %p86, %s87, %s88
    %p92 = pneg %p86
    %p93 = scmp.eq.s32.totalorder %s9, 7
    %p94 = por %p92, %p93
    %p95 = scmp.ne.s32.totalorder %s87, %s90
    %p96 = scmp.eq.s32.totalorder %s9, 0
    %p97 = por %p95, %p96
    %p98 = scmp.ne.s32.totalorder %s87, %s90
    %p99 = scmp.eq.s32.totalorder %s14, 7
    %p100 = por %p98, %p99
    %p101 = scmp.ne.s32.totalorder %s90, %s91
    %p102 = scmp.eq.s32.totalorder %s14, 0
    %p103 = por %p101, %p102
    %p104 = scmp.ne.s32.totalorder %s90, %s91
    %p105 = scmp.eq.s32.totalorder %s15, 7
    %p106 = por %p104, %p105
    %p108 = scmp.ne.s32.totalorder %s91, %s107
    %p109 = scmp.eq.s32.totalorder %s15, 0
    %p110 = por %p108, %p109
    %p111 = scmp.le.s32.totalorder 1, %s9
    %p112 = scmp.lt.s32.totalorder %s9, 9
    %p113 = pnand %p111, %p112
    %p114 = pneg %p113
    // Predicated region
    $region9: #{dtm_forward.1} parent=5 // pred_check
      _
    $region10: #{dtm_forward.1} parent=5 // pred_check_branch
      %116 = sbr.rel (%p113) target = $region12
    $region11: #{dtm_forward.1} parent=5 // pred_region
      %s117 = ssub.s32 %s9, 1
      // Predicated region
      $region13: #{dtm_forward.1} parent=11 // pred_check
        %p118 = pneg %p56
      $region14: #{dtm_forward.1} parent=11 // pred_check_branch
        %120 = sbr.rel (%p118) target = $region16
      $region15: #{dtm_forward.1} parent=11 // pred_region
        _
      $region16: #{dtm_forward.1} parent=11 // pred_fallthru
        _
      // Predicated region
      $region17: #{dtm_forward.1} parent=11 // pred_check
        %p121 = pneg %p77
      $region18: #{dtm_forward.1} parent=11 // pred_check_branch
        %123 = sbr.rel (%p121) target = $region20
      $region19: #{dtm_forward.1} parent=11 // pred_region
        _
      $region20: #{dtm_forward.1} parent=11 // pred_fallthru
        _
    $region12: #{dtm_forward.1} parent=5 // pred_fallthru
      _
    %p124 = scmp.lt.s32.totalorder %s9, 8
    // Predicated region
    $region21: #{dtm_forward.1} parent=5 // pred_check
      %p125 = pneg %p124
    $region22: #{dtm_forward.1} parent=5 // pred_check_branch
      %127 = sbr.rel (%p125) target = $region24
    $region23: #{dtm_forward.1} parent=5 // pred_region
      // Predicated region
      $region25: #{dtm_forward.1} parent=23 // pred_check
        %p128 = pneg %p29
      $region26: #{dtm_forward.1} parent=23 // pred_check_branch
        %130 = sbr.rel (%p128) target = $region28
      $region27: #{dtm_forward.1} parent=23 // pred_region
        %s131 = smul.u32 16, %s9
        %p132 = scmp.lt.s32.totalorder %s131, 127
        %s133 = scalar_select %p132, %s131, 127
        %s134 = smul.addr %s133, 2
        %s135 = smul.addr %s134, 4
        %s136 = scalar_lea.vmem %s0, %s135
        %s137 = smul.u32 16, %s9
      $region28: #{dtm_forward.1} parent=23 // pred_fallthru
        _
    $region24: #{dtm_forward.1} parent=5 // pred_fallthru
      _
    %p138 = scmp.le.s32.totalorder 1, %s9
    %p139 = scmp.lt.s32.totalorder %s9, 9
    %p140 = pnand %p138, %p139
    %p141 = pneg %p140
    // Predicated region
    $region29: #{dtm_forward.1} parent=5 // pred_check
      _
    $region30: #{dtm_forward.1} parent=5 // pred_check_branch
      %143 = sbr.rel (%p140) target = $region32
    $region31: #{dtm_forward.1} parent=5 // pred_region
      %s144 = ssub.s32 %s9, 1
      %s145 = smul.u32 16, %s14
      %p146 = scmp.lt.s32.totalorder %s145, 127
      %s147 = scalar_select %p146, %s145, 127
      %s148 = smul.addr %s147, 2
      %s149 = smul.addr %s148, 4
      %s150 = scalar_lea.vmem %s0, %s149
      %p151 = pneg %p35
      %p152 = pneg %p32
      %p153 = pneg %p56
      %p154 = pneg %p53
      %p155 = pneg %p77
      %p156 = pneg %p74
      %p157 = pneg %p103
      %p158 = pneg %p100
      %s159 = smul.u32 16, %s14
      %p160 = scmp.lt.s32.totalorder %s159, 127
      %s161 = scalar_select %p160, %s159, 127
      %s162 = smul.addr %s161, 4
      %s163 = scalar_lea.vmem %s3, %s162
      %s164 = smul.u32 16, %s14
      %p165 = scmp.lt.s32.totalorder %s164, 127
      %s166 = scalar_select %p165, %s164, 127
      %s167 = smul.addr %s166, 2
      %s168 = smul.addr %s167, 4
      %s169 = scalar_lea.vmem %s0, %s168
      %s170 = smul.u32 16, %s14
      %s171 = smul.u32 16, %s14
      %p172 = scmp.lt.s32.totalorder %s171, 127
      %s173 = scalar_select %p172, %s171, 127
      %s174 = smul.addr %s173, 4
      %s175 = scalar_lea.vmem %s3, %s174
      %s176 = smul.u32 16, %s14
      %v178 = vld [vmem:[%s169] sm:$0xff]
      %v179 = vld [vmem:[%s169 + $0x8] sm:$0xff]
      %v180 = vld [vmem:[%s169 + $0x10] sm:$0xff]
      %v181 = vld [vmem:[%s169 + $0x18] sm:$0xff]
      %v182 = vld [vmem:[%s169 + $0x20] sm:$0xff]
      %v183 = vld [vmem:[%s169 + $0x28] sm:$0xff]
      %v184 = vld [vmem:[%s169 + $0x30] sm:$0xff]
      %v185 = vld [vmem:[%s169 + $0x38] sm:$0xff]
      %v186 = vld [vmem:[%s169 + $0x40] sm:$0xff]
      %v187 = vld [vmem:[%s169 + $0x48] sm:$0xff]
      %v188 = vld [vmem:[%s169 + $0x50] sm:$0xff]
      %v189 = vld [vmem:[%s169 + $0x58] sm:$0xff]
      %v190 = vld [vmem:[%s169 + $0x60] sm:$0xff]
      %v191 = vld [vmem:[%s169 + $0x68] sm:$0xff]
      %v192 = vld [vmem:[%s169 + $0x70] sm:$0xff]
      %v193 = vld [vmem:[%s169 + $0x78] sm:$0xff]
      %v194 = vld [vmem:[%s1] sm:$0xf]
      %v195 = vld [vmem:[%s1 + $0x4] sm:$0xf]
      %v196 = vld [vmem:[%s1 + $0x8] sm:$0xf]
      %v197 = vld [vmem:[%s1 + $0xc] sm:$0xf]
      %v198 = vld [vmem:[%s1 + $0x10] sm:$0xf]
      %v199 = vld [vmem:[%s1 + $0x14] sm:$0xf]
      %v200 = vld [vmem:[%s1 + $0x18] sm:$0xf]
      %v201 = vld [vmem:[%s1 + $0x1c] sm:$0xf]
      %v202 = vld [vmem:[%s1 + $0x20] sm:$0xf]
      %v203 = vld [vmem:[%s1 + $0x24] sm:$0xf]
      %v204 = vld [vmem:[%s1 + $0x28] sm:$0xf]
      %v205 = vld [vmem:[%s1 + $0x2c] sm:$0xf]
      %v206 = vld [vmem:[%s1 + $0x30] sm:$0xf]
      %v207 = vld [vmem:[%s1 + $0x34] sm:$0xf]
      %v208 = vld [vmem:[%s1 + $0x38] sm:$0xf]
      %v209 = vld [vmem:[%s1 + $0x3c] sm:$0xf]
      %v210 = vld [vmem:[%s1 + $0x40] sm:$0xf]
      %v211 = vld [vmem:[%s1 + $0x44] sm:$0xf]
      %v212 = vld [vmem:[%s1 + $0x48] sm:$0xf]
      %v213 = vld [vmem:[%s1 + $0x4c] sm:$0xf]
      %v214 = vld [vmem:[%s1 + $0x50] sm:$0xf]
      %v215 = vld [vmem:[%s1 + $0x54] sm:$0xf]
      %v216 = vld [vmem:[%s1 + $0x58] sm:$0xf]
      %v217 = vld [vmem:[%s1 + $0x5c] sm:$0xf]
      %v218 = vld [vmem:[%s2] sm:$0x1]
      %v220 = vlaneseq
      %v221 = vshrl.u32 %v220, 7
      %v222 = vsub.s32 0, %v221
      %v223 = vrot.slane %v218, %v222
      %v241 = vunpack.c.l.b16 %v178
      %v242 = vunpack.c.h.b16 %v178
      %v243 = vunpack.c.l.b16 %v179
      %v244 = vunpack.c.h.b16 %v179
      %v245 = vunpack.c.l.b16 %v180
      %v246 = vunpack.c.h.b16 %v180
      %v247 = vunpack.c.l.b16 %v181
      %v248 = vunpack.c.h.b16 %v181
      %v249 = vunpack.c.l.b16 %v182
      %v250 = vunpack.c.h.b16 %v182
      %v251 = vunpack.c.l.b16 %v183
      %v252 = vunpack.c.h.b16 %v183
      %v253 = vunpack.c.l.b16 %v184
      %v254 = vunpack.c.h.b16 %v184
      %v255 = vunpack.c.l.b16 %v185
      %v256 = vunpack.c.h.b16 %v185
      %v257 = vunpack.c.l.b16 %v186
      %v258 = vunpack.c.h.b16 %v186
      %v259 = vunpack.c.l.b16 %v187
      %v260 = vunpack.c.h.b16 %v187
      %v261 = vunpack.c.l.b16 %v188
      %v262 = vunpack.c.h.b16 %v188
      %v263 = vunpack.c.l.b16 %v189
      %v264 = vunpack.c.h.b16 %v189
      %v265 = vunpack.c.l.b16 %v190
      %v266 = vunpack.c.h.b16 %v190
      %v267 = vunpack.c.l.b16 %v191
      %v268 = vunpack.c.h.b16 %v191
      %v269 = vunpack.c.l.b16 %v192
      %v270 = vunpack.c.h.b16 %v192
      %v271 = vunpack.c.l.b16 %v193
      %v272 = vunpack.c.h.b16 %v193
      %v273 = vpack.c.b16 %v243, %v241
      %v274 = vpack.c.b16 %v244, %v242
      %v275 = vpack.c.b16 %v247, %v245
      %v276 = vpack.c.b16 %v248, %v246
      %v277 = vpack.c.b16 %v251, %v249
      %v278 = vpack.c.b16 %v252, %v250
      %v279 = vpack.c.b16 %v255, %v253
      %v280 = vpack.c.b16 %v256, %v254
      %v281 = vpack.c.b16 %v259, %v257
      %v282 = vpack.c.b16 %v260, %v258
      %v283 = vpack.c.b16 %v263, %v261
      %v284 = vpack.c.b16 %v264, %v262
      %v285 = vpack.c.b16 %v267, %v265
      %v286 = vpack.c.b16 %v268, %v266
      %v287 = vpack.c.b16 %v271, %v269
      %v288 = vpack.c.b16 %v272, %v270
      %v321 = vunpack.c.l.b16 %v194
      %v322 = vunpack.c.l.b16 %v195
      %v323 = vunpack.c.l.b16 %v196
      %v324 = vunpack.c.l.b16 %v197
      %v325 = vunpack.c.l.b16 %v198
      %v326 = vunpack.c.l.b16 %v199
      %v327 = vunpack.c.l.b16 %v200
      %v328 = vunpack.c.l.b16 %v201
      %v329 = vunpack.c.l.b16 %v202
      %v330 = vunpack.c.l.b16 %v203
      %v331 = vunpack.c.l.b16 %v204
      %v332 = vunpack.c.l.b16 %v205
      %v333 = vunpack.c.l.b16 %v206
      %v334 = vunpack.c.l.b16 %v207
      %v335 = vunpack.c.l.b16 %v208
      %v336 = vunpack.c.l.b16 %v209
      %v337 = vunpack.c.l.b16 %v210
      %v338 = vunpack.c.l.b16 %v211
      %v339 = vunpack.c.l.b16 %v212
      %v340 = vunpack.c.l.b16 %v213
      %v341 = vunpack.c.l.b16 %v214
      %v342 = vunpack.c.l.b16 %v215
      %v343 = vunpack.c.l.b16 %v216
      %v344 = vunpack.c.l.b16 %v217
      %v345 = vpack.c.b16 %v322, %v321
      %v346 = vpack.c.b16 %v324, %v323
      %v347 = vpack.c.b16 %v326, %v325
      %v348 = vpack.c.b16 %v328, %v327
      %v349 = vpack.c.b16 %v330, %v329
      %v350 = vpack.c.b16 %v332, %v331
      %v351 = vpack.c.b16 %v334, %v333
      %v352 = vpack.c.b16 %v336, %v335
      %v353 = vpack.c.b16 %v338, %v337
      %v354 = vpack.c.b16 %v340, %v339
      %v355 = vpack.c.b16 %v342, %v341
      %v356 = vpack.c.b16 %v344, %v343
      %vm369 = vcmask 523264
      %v371 = vsel %vm369, %v274, 0
      %v374 = vsel %vm369, %v276, 0
      %v377 = vsel %vm369, %v278, 0
      %v380 = vsel %vm369, %v280, 0
      %v383 = vsel %vm369, %v282, 0
      %v386 = vsel %vm369, %v284, 0
      %v389 = vsel %vm369, %v286, 0
      %v392 = vsel %vm369, %v288, 0
      %394 = vmatprep.subr.bf16.mxu0 0
      %395 = vmatpush1.bf16.msra.mxu0 %v345
      %396 = vmatprep.subr.bf16.mxu0 0
      %397 = vmatpush1.bf16.msra.mxu0 %v346
      %398 = vmatprep.subr.bf16.mxu0 0
      %399 = vmatpush1.bf16.msra.mxu0 %v347
      %400 = vmatprep.subr.bf16.mxu0 0
      %401 = vmatpush1.bf16.msra.mxu0 %v348
      %402 = vmatprep.subr.bf16.mxu0 0
      %403 = vmatpush1.bf16.msra.mxu0 %v349
      %404 = vmatprep.subr.bf16.mxu0 0
      %405 = vmatpush1.bf16.msra.mxu0 %v350
      %406 = vmatprep.subr.bf16.mxu0 0
      %407 = vmatpush1.bf16.msra.mxu0 %v351
      %408 = vmatprep.subr.bf16.mxu0 0
      %409 = vmatpush1.bf16.msra.mxu0 %v352
      %410 = vmatprep.subr.bf16.mxu0 0
      %411 = vmatpush1.bf16.msra.mxu0 %v353
      %412 = vmatprep.subr.bf16.mxu0 0
      %413 = vmatpush1.bf16.msra.mxu0 %v354
      %414 = vmatprep.subr.bf16.mxu0 0
      %415 = vmatpush1.bf16.msra.mxu0 %v355
      %416 = vmatprep.subr.bf16.mxu0 0
      %417 = vmatpush1.bf16.msra.mxu0 %v356
      %418 = vmatprep.subr.bf16.mxu0 0
      %419 = vmatpush1.bf16.msra.mxu0 0
      %420 = vmatprep.subr.bf16.mxu0 0
      %421 = vmatpush1.bf16.msra.mxu0 0
      %422 = vmatprep.subr.bf16.mxu0 0
      %423 = vmatpush1.bf16.msra.mxu0 0
      %424 = vmatprep.subr.bf16.mxu0 0
      %425 = vmatpush1.bf16.msra.mxu0 0
      %426 = vmatprep.mubr.bf16.mxu0 %v371
      %427 = vmatmul.mubr.bf16.gmra.mrb[0].mxu0 %v273
      %v428 = vpop.f32.mrb[0].mxu0
      %v429 = vadd.f32 %v223, %v428
      %v430 = vpop.f32.mrb[0].mxu0
      %v431 = vpop.f32.mrb[0].mxu0
      %v432 = vadd.f32 %v223, %v431
      %v433 = vpop.f32.mrb[0].mxu0
      %434 = vmatprep.mubr.bf16.mxu0 %v374
      %435 = vmatmul.mubr.bf16.gmra.mrb[0].mxu0 %v275
      %v436 = vpop.f32.mrb[0].mxu0
      %v437 = vadd.f32 %v223, %v436
      %v438 = vpop.f32.mrb[0].mxu0
      %v439 = vpop.f32.mrb[0].mxu0
      %v440 = vadd.f32 %v223, %v439
      %v441 = vpop.f32.mrb[0].mxu0
      %442 = vmatprep.mubr.bf16.mxu0 %v377
      %443 = vmatmul.mubr.bf16.gmra.mrb[0].mxu0 %v277
      %v444 = vpop.f32.mrb[0].mxu0
      %v445 = vadd.f32 %v223, %v444
      %v446 = vpop.f32.mrb[0].mxu0
      %v447 = vpop.f32.mrb[0].mxu0
      %v448 = vadd.f32 %v223, %v447
      %v449 = vpop.f32.mrb[0].mxu0
      %450 = vmatprep.mubr.bf16.mxu0 %v380
      %451 = vmatmul.mubr.bf16.gmra.mrb[0].mxu0 %v279
      %v452 = vpop.f32.mrb[0].mxu0
      %v453 = vadd.f32 %v223, %v452
      %v454 = vpop.f32.mrb[0].mxu0
      %v455 = vpop.f32.mrb[0].mxu0
      %v456 = vadd.f32 %v223, %v455
      %v457 = vpop.f32.mrb[0].mxu0
      %458 = vmatprep.mubr.bf16.mxu0 %v383
      %459 = vmatmul.mubr.bf16.gmra.mrb[0].mxu0 %v281
      %v460 = vpop.f32.mrb[0].mxu0
      %v461 = vadd.f32 %v223, %v460
      %v462 = vpop.f32.mrb[0].mxu0
      %v463 = vpop.f32.mrb[0].mxu0
      %v464 = vadd.f32 %v223, %v463
      %v465 = vpop.f32.mrb[0].mxu0
      %466 = vmatprep.mubr.bf16.mxu0 %v386
      %467 = vmatmul.mubr.bf16.gmra.mrb[0].mxu0 %v283
      %v468 = vpop.f32.mrb[0].mxu0
      %v469 = vadd.f32 %v223, %v468
      %v470 = vpop.f32.mrb[0].mxu0
      %v471 = vpop.f32.mrb[0].mxu0
      %v472 = vadd.f32 %v223, %v471
      %v473 = vpop.f32.mrb[0].mxu0
      %474 = vmatprep.mubr.bf16.mxu0 %v389
      %475 = vmatmul.mubr.bf16.gmra.mrb[0].mxu0 %v285
      %v476 = vpop.f32.mrb[0].mxu0
      %v477 = vadd.f32 %v223, %v476
      %v478 = vpop.f32.mrb[0].mxu0
      %v479 = vpop.f32.mrb[0].mxu0
      %v480 = vadd.f32 %v223, %v479
      %v481 = vpop.f32.mrb[0].mxu0
      %482 = vmatprep.mubr.bf16.mxu0 %v392
      %483 = vmatmul.mubr.bf16.gmra.mrb[0].mxu0 %v287
      %v484 = vpop.f32.mrb[0].mxu0
      %v485 = vadd.f32 %v223, %v484
      %v486 = vpop.f32.mrb[0].mxu0
      %v487 = vpop.f32.mrb[0].mxu0
      %v488 = vadd.f32 %v223, %v487
      %v489 = vpop.f32.mrb[0].mxu0
      %490 = vdwg.mxu0
      %v491 = vpack.c.bf16 %v432, %v429
      %v492 = vpack.c.bf16 %v440, %v437
      %v493 = vpack.c.bf16 %v448, %v445
      %v494 = vpack.c.bf16 %v456, %v453
      %v495 = vpack.c.bf16 %v464, %v461
      %v496 = vpack.c.bf16 %v472, %v469
      %v497 = vpack.c.bf16 %v480, %v477
      %v498 = vpack.c.bf16 %v488, %v485
      %v507 = vunpack.c.l.b16 %v491
      %v508 = vunpack.c.h.b16 %v491
      %v509 = vunpack.c.l.b16 %v492
      %v510 = vunpack.c.h.b16 %v492
      %v511 = vunpack.c.l.b16 %v493
      %v512 = vunpack.c.h.b16 %v493
      %v513 = vunpack.c.l.b16 %v494
      %v514 = vunpack.c.h.b16 %v494
      %v515 = vunpack.c.l.b16 %v495
      %v516 = vunpack.c.h.b16 %v495
      %v517 = vunpack.c.l.b16 %v496
      %v518 = vunpack.c.h.b16 %v496
      %v519 = vunpack.c.l.b16 %v497
      %v520 = vunpack.c.h.b16 %v497
      %v521 = vunpack.c.l.b16 %v498
      %v522 = vunpack.c.h.b16 %v498
      %v523 = vpack.c.b16 %v507, %v507
      %v524 = vpack.c.b16 %v508, %v508
      %v525 = vpack.c.b16 %v509, %v509
      %v526 = vpack.c.b16 %v510, %v510
      %v527 = vpack.c.b16 %v511, %v511
      %v528 = vpack.c.b16 %v512, %v512
      %v529 = vpack.c.b16 %v513, %v513
      %v530 = vpack.c.b16 %v514, %v514
      %v531 = vpack.c.b16 %v515, %v515
      %v532 = vpack.c.b16 %v516, %v516
      %v533 = vpack.c.b16 %v517, %v517
      %v534 = vpack.c.b16 %v518, %v518
      %v535 = vpack.c.b16 %v519, %v519
      %v536 = vpack.c.b16 %v520, %v520
      %v537 = vpack.c.b16 %v521, %v521
      %v538 = vpack.c.b16 %v522, %v522
      %555 = vst [vmem:[%s175] sm:$0xf] %v523
      %556 = vst [vmem:[%s175 + $0x4] sm:$0xf] %v524
      %557 = vst [vmem:[%s175 + $0x8] sm:$0xf] %v525
      %558 = vst [vmem:[%s175 + $0xc] sm:$0xf] %v526
      %559 = vst [vmem:[%s175 + $0x10] sm:$0xf] %v527
      %560 = vst [vmem:[%s175 + $0x14] sm:$0xf] %v528
      %561 = vst [vmem:[%s175 + $0x18] sm:$0xf] %v529
      %562 = vst [vmem:[%s175 + $0x1c] sm:$0xf] %v530
      %563 = vst [vmem:[%s175 + $0x20] sm:$0xf] %v531
      %564 = vst [vmem:[%s175 + $0x24] sm:$0xf] %v532
      %565 = vst [vmem:[%s175 + $0x28] sm:$0xf] %v533
      %566 = vst [vmem:[%s175 + $0x2c] sm:$0xf] %v534
      %567 = vst [vmem:[%s175 + $0x30] sm:$0xf] %v535
      %568 = vst [vmem:[%s175 + $0x34] sm:$0xf] %v536
      %569 = vst [vmem:[%s175 + $0x38] sm:$0xf] %v537
      %570 = vst [vmem:[%s175 + $0x3c] sm:$0xf] %v538
      %s571 = smul.u32 16, %s14
      %p572 = scmp.lt.s32.totalorder %s571, 127
      %s573 = scalar_select %p572, %s571, 127
      %s574 = smul.addr %s573, 4
      %s575 = scalar_lea.vmem %s3, %s574
      // Predicated region
      $region33: #{dtm_forward.1} parent=31 // pred_check
        %p576 = pneg %p100
      $region34: #{dtm_forward.1} parent=31 // pred_check_branch
        %578 = sbr.rel (%p576) target = $region36
      $region35: #{dtm_forward.1} parent=31 // pred_region
        %s579 = smul.u32 16, %s14
      $region36: #{dtm_forward.1} parent=31 // pred_fallthru
        _
    $region32: #{dtm_forward.1} parent=5 // pred_fallthru
      _
    %p580 = scmp.le.s32.totalorder 2, %s9
    // Predicated region
    $region37: #{dtm_forward.1} parent=5 // pred_check
      %p581 = pneg %p580
    $region38: #{dtm_forward.1} parent=5 // pred_check_branch
      %583 = sbr.rel (%p581) target = $region40
    $region39: #{dtm_forward.1} parent=5 // pred_region
      %s584 = ssub.s32 %s9, 2
      // Predicated region
      $region41: #{dtm_forward.1} parent=39 // pred_check
        %p585 = pneg %p106
      $region42: #{dtm_forward.1} parent=39 // pred_check_branch
        %587 = sbr.rel (%p585) target = $region44
      $region43: #{dtm_forward.1} parent=39 // pred_region
        %s588 = smul.u32 16, %s15
        %p589 = scmp.lt.s32.totalorder %s588, 127
        %s590 = scalar_select %p589, %s588, 127
        %s591 = smul.addr %s590, 4
        %s592 = scalar_lea.vmem %s3, %s591
      $region44: #{dtm_forward.1} parent=39 // pred_fallthru
        _
    $region40: #{dtm_forward.1} parent=5 // pred_fallthru
      _
  $region6: #{dtm_forward.1} parent=0 // loop_footer
    %s13 = sadd.s32 1, %s9
  $region7: #{dtm_forward.1} parent=0 // loop_footer_branch
    %8 = sbr.rel target = $region3
  $region8: #{dtm_forward.1} parent=0 // loop_exit
    _

</llo_original>
